<compile_context>
chip_gen: v7x
topology: tpu7x:2x2x1
jax: 0.10.0
libtpu: 0.0.40
codegen_flags: <defaults>
</compile_context>

<pallas_src>
import functools
import math

import jax
import jax.numpy as jnp
from jax import lax
from jax.experimental import pallas as pl
from jax.experimental.pallas import tpu as pltpu


# ---------------------------------------------------------------------------
# Kernel 1: fused Q/K/V projections — full-width (D, H*dk) bf16 MXU matmuls.
# ---------------------------------------------------------------------------
def _qkv_proj_kernel(q_ref, k_ref, v_ref, wq_ref, wk_ref, wv_ref,
                     qo_ref, ko_ref, vo_ref, *, scale):
    q = q_ref[0]                                              # (ts, D) bf16
    k = k_ref[0]
    v = v_ref[0]
    qh = jnp.dot(q, wq_ref[...], preferred_element_type=jnp.float32)
    kh = jnp.dot(k, wk_ref[...], preferred_element_type=jnp.float32)
    vh = jnp.dot(v, wv_ref[...], preferred_element_type=jnp.float32)
    # Fold the 1/sqrt(dim_k) softmax scale into Q here (S*dk work instead of
    # S*S work inside the attention loop).
    qo_ref[0] = (qh * scale).astype(qo_ref.dtype)
    ko_ref[0] = kh.astype(ko_ref.dtype)
    vo_ref[0] = vh.astype(vo_ref.dtype)


# ---------------------------------------------------------------------------
# Kernel 2: flash attention (online softmax) + fused output projection.
# grid = (batch, q_tiles, kv_tiles); kv is the reduction axis ("arbitrary").
# ---------------------------------------------------------------------------
def _flash_attn_kernel(qh_ref, kh_ref, vh_ref, wo_ref, bo_ref, o_ref,
                       m_sc, l_sc, acc_sc,
                       *, num_heads, dim_k, dim_v, tq, tkv, is_causal):
    qi = pl.program_id(1)
    ki = pl.program_id(2)
    neg_big = jnp.float32(-1e30)   # finite mask value: no exp(-inf - -inf) NaNs

    @pl.when(ki == 0)
    def _init():
        m_sc[...] = jnp.full(m_sc.shape, neg_big, m_sc.dtype)
        l_sc[...] = jnp.zeros(l_sc.shape, l_sc.dtype)
        acc_sc[...] = jnp.zeros(acc_sc.shape, acc_sc.dtype)

    def _compute():
        q = qh_ref[0]            # (tq,  H*dk) bf16 (already scaled)
        k = kh_ref[0]            # (tkv, H*dk) bf16
        v = vh_ref[0]            # (tkv, H*dv) bf16
        if is_causal:
            row = qi * tq + lax.broadcasted_iota(jnp.int32, (tq, tkv), 0)
            col = ki * tkv + lax.broadcasted_iota(jnp.int32, (tq, tkv), 1)
            keep = col <= row
        # Static per-head loop over lane slices of the fused projections;
        # every matmul is a clean 2-D MXU op.
        for h in range(num_heads):
            q_h = q[:, h * dim_k:(h + 1) * dim_k]
            k_h = k[:, h * dim_k:(h + 1) * dim_k]
            v_h = v[:, h * dim_v:(h + 1) * dim_v]
            # q_h @ k_h^T without materializing a transpose.
            s = lax.dot_general(q_h, k_h, (((1,), (1,)), ((), ())),
                                preferred_element_type=jnp.float32)
            if is_causal:
                s = jnp.where(keep, s, neg_big)
            m_prev = m_sc[h]                                   # (tq, 1)
            m_new = jnp.maximum(m_prev, jnp.max(s, axis=-1, keepdims=True))
            alpha = jnp.exp(m_prev - m_new)
            p = jnp.exp(s - m_new)                             # (tq, tkv) f32
            l_sc[h] = alpha * l_sc[h] + jnp.sum(p, axis=-1, keepdims=True)
            acc_sc[h] = alpha * acc_sc[h] + jnp.dot(
                p.astype(v_h.dtype), v_h, preferred_element_type=jnp.float32)
            m_sc[h] = m_new

    if is_causal:
        # Skip kv blocks lying entirely above the causal diagonal for this
        # q tile (halves attention FLOPs).  The matching index_map clamp in
        # the wrapper makes the skipped blocks also free of DMA traffic.
        @pl.when(ki * tkv <= qi * tq + (tq - 1))
        def _():
            _compute()
    else:
        _compute()

    @pl.when(ki == pl.num_programs(2) - 1)
    def _finalize():
        # Normalize each head and concatenate in registers to (tq, H*dv),
        # then a single wide output projection (contraction dim = H*dv = D)
        # plus bias; output tile is written exactly once.
        ctx = jnp.concatenate(
            [acc_sc[h] * pl.reciprocal(l_sc[h], approx=True)
             for h in range(num_heads)], axis=-1)
        out = jnp.dot(ctx.astype(wo_ref.dtype), wo_ref[...],
                      preferred_element_type=jnp.float32)
        o_ref[0] = (out + bo_ref[...]).astype(o_ref.dtype)


def _pick_tile(dim, max_tile):
    if dim <= max_tile:
        return dim
    for t in (max_tile, 512, 256, 128, 64, 32, 16):
        if t <= max_tile and dim % t == 0:
            return t
    return dim


def multi_head_attention(q, k, v, wq, wk, wv, wo, bo, *, is_causal=False):
    """q, k, v: (B, S, D) f32.  wq/wk: (H, D, dk); wv: (H, D, dv);
    wo: (H, dv, D); bo: (1, D).  Returns (B, S, D) f32."""
    B, S, D = q.shape
    H, _, dk = wq.shape
    dv = wv.shape[-1]

    # Fuse per-head weights into full-width, lane-dense matrices (bf16 MXU).
    wq_f = jnp.transpose(wq, (1, 0, 2)).reshape(D, H * dk).astype(jnp.bfloat16)
    wk_f = jnp.transpose(wk, (1, 0, 2)).reshape(D, H * dk).astype(jnp.bfloat16)
    wv_f = jnp.transpose(wv, (1, 0, 2)).reshape(D, H * dv).astype(jnp.bfloat16)
    wo_f = wo.reshape(H * dv, D).astype(jnp.bfloat16)
    bo_f = bo.astype(jnp.float32)

    q_b = q.astype(jnp.bfloat16)
    k_b = k.astype(jnp.bfloat16)
    v_b = v.astype(jnp.bfloat16)

    # ---------------- fused QKV projection ----------------
    ts = _pick_tile(S, 512)
    assert S % ts == 0
    qh, kh, vh = pl.pallas_call(
        functools.partial(_qkv_proj_kernel, scale=1.0 / math.sqrt(dk)),
        out_shape=(jax.ShapeDtypeStruct((B, S, H * dk), jnp.bfloat16),
                   jax.ShapeDtypeStruct((B, S, H * dk), jnp.bfloat16),
                   jax.ShapeDtypeStruct((B, S, H * dv), jnp.bfloat16)),
        grid_spec=pltpu.PrefetchScalarGridSpec(
            num_scalar_prefetch=0,
            grid=(B, S // ts),
            in_specs=[
                pl.BlockSpec((1, ts, D), lambda b, s: (b, s, 0)),
                pl.BlockSpec((1, ts, D), lambda b, s: (b, s, 0)),
                pl.BlockSpec((1, ts, D), lambda b, s: (b, s, 0)),
                pl.BlockSpec((D, H * dk), lambda b, s: (0, 0)),
                pl.BlockSpec((D, H * dk), lambda b, s: (0, 0)),
                pl.BlockSpec((D, H * dv), lambda b, s: (0, 0)),
            ],
            out_specs=[
                pl.BlockSpec((1, ts, H * dk), lambda b, s: (b, s, 0)),
                pl.BlockSpec((1, ts, H * dk), lambda b, s: (b, s, 0)),
                pl.BlockSpec((1, ts, H * dv), lambda b, s: (b, s, 0)),
            ],
        ),
        compiler_params=pltpu.CompilerParams(
            dimension_semantics=("parallel", "parallel")),
    )(q_b, k_b, v_b, wq_f, wk_f, wv_f)

    # ---------------- flash attention + output projection ----------------
    tq = _pick_tile(S, 256)
    tkv = _pick_tile(S, 256)
    assert S % tq == 0 and S % tkv == 0

    if is_causal:
        # For kv blocks entirely above the causal diagonal (compute skipped
        # in-kernel via pl.when), clamp the block index to the last valid kv
        # block of this q tile; the pipeline sees an unchanged index and
        # skips the HBM->VMEM copy entirely.
        def kv_map(b, qi, ki):
            return (b, jnp.minimum(ki, (qi * tq + (tq - 1)) // tkv), 0)
    else:
        def kv_map(b, qi, ki):
            return (b, ki, 0)

    kernel = functools.partial(
        _flash_attn_kernel, num_heads=H, dim_k=dk, dim_v=dv,
        tq=tq, tkv=tkv, is_causal=is_causal)

    return pl.pallas_call(
        kernel,
        out_shape=jax.ShapeDtypeStruct((B, S, D), jnp.float32),
        grid_spec=pltpu.PrefetchScalarGridSpec(
            num_scalar_prefetch=0,
            grid=(B, S // tq, S // tkv),
            in_specs=[
                pl.BlockSpec((1, tq, H * dk), lambda b, qi, ki: (b, qi, 0)),
                pl.BlockSpec((1, tkv, H * dk), kv_map),
                pl.BlockSpec((1, tkv, H * dv), kv_map),
                pl.BlockSpec((H * dv, D), lambda b, qi, ki: (0, 0)),
                pl.BlockSpec((1, D), lambda b, qi, ki: (0, 0)),
            ],
            out_specs=pl.BlockSpec((1, tq, D), lambda b, qi, ki: (b, qi, 0)),
            scratch_shapes=[
                pltpu.VMEM((H, tq, 1), jnp.float32),    # running max
                pltpu.VMEM((H, tq, 1), jnp.float32),    # running sum
                pltpu.VMEM((H, tq, dv), jnp.float32),   # per-head accumulator
            ],
        ),
        compiler_params=pltpu.CompilerParams(
            dimension_semantics=("parallel", "parallel", "arbitrary"),
            vmem_limit_bytes=48 * 1024 * 1024),
    )(qh, kh, vh, wo_f, bo_f)


def _reference(q, k, v, wq, wk, wv, wo, bo, *, is_causal=False):
    """Pure-JAX f32 reference mirroring the PyTorch forward."""
    H, D, dk = wq.shape
    B, S, _ = q.shape
    outs = []
    for h in range(H):
        qh = q @ wq[h]
        kh = k @ wk[h]
        vh = v @ wv[h]
        s = jnp.einsum('bqd,bkd->bqk', qh, kh) / math.sqrt(dk)
        if is_causal:
            mask = jnp.triu(jnp.ones((S, S), bool), k=1)
            s = jnp.where(mask[None], -jnp.inf, s)
        attn = jax.nn.softmax(s, axis=-1)
        outs.append(jnp.einsum('bqk,bkv->bqv', attn, vh))
    concat = jnp.concatenate(outs, axis=-1)                        # (B, S, H*dv)
    wo_full = jnp.concatenate([wo[h] for h in range(H)], axis=0)   # (H*dv, D)
    return concat @ wo_full + bo[0]


if __name__ == "__main__":
    # Small shapes consistent with the module: model_dim divisible by num_heads.
    B, S, D, H = 2, 8, 32, 4
    dk = dv = D // H

    key = jax.random.PRNGKey(0)
    keys = jax.random.split(key, 8)
    q = jax.random.normal(keys[0], (B, S, D), jnp.float32)
    k = jax.random.normal(keys[1], (B, S, D), jnp.float32)
    v = jax.random.normal(keys[2], (B, S, D), jnp.float32)

    # Synthetic parameters (shapes follow the nn.Linear definitions).
    scale_in = 1.0 / math.sqrt(D)
    scale_out = 1.0 / math.sqrt(dv * H)
    wq = jax.random.uniform(keys[3], (H, D, dk), jnp.float32, -scale_in, scale_in)
    wk = jax.random.uniform(keys[4], (H, D, dk), jnp.float32, -scale_in, scale_in)
    wv = jax.random.uniform(keys[5], (H, D, dv), jnp.float32, -scale_in, scale_in)
    wo = jax.random.uniform(keys[6], (H, dv, D), jnp.float32, -scale_out, scale_out)
    bo = jax.random.uniform(keys[7], (1, D), jnp.float32, -scale_out, scale_out)

    ok = True
    for is_causal in (False, True):
        out = multi_head_attention(q, k, v, wq, wk, wv, wo, bo,
                                   is_causal=is_causal)
        out = jax.block_until_ready(out)
        ref = _reference(q, k, v, wq, wk, wv, wo, bo, is_causal=is_causal)
        # bf16 MXU inputs -> loosened tolerance vs. the pure-f32 reference.
        ok = ok and bool(jnp.allclose(out, ref, atol=5e-2, rtol=5e-2))

    print("KERNEL_OK" if ok else "KERNEL_MISMATCH")
</pallas_src>

<mosaic_0001>
module attributes {stable_mosaic.version = 11 : i64} {
  func.func @_qkv_proj_kernel(%arg0: i32, %arg1: i32, %arg2: memref<1x8x32xbf16, #tpu.memory_space<vmem>>, %arg3: memref<1x8x32xbf16, #tpu.memory_space<vmem>>, %arg4: memref<1x8x32xbf16, #tpu.memory_space<vmem>>, %arg5: memref<32x32xbf16, #tpu.memory_space<vmem>>, %arg6: memref<32x32xbf16, #tpu.memory_space<vmem>>, %arg7: memref<32x32xbf16, #tpu.memory_space<vmem>>, %arg8: memref<1x8x32xbf16, #tpu.memory_space<vmem>>, %arg9: memref<1x8x32xbf16, #tpu.memory_space<vmem>>, %arg10: memref<1x8x32xbf16, #tpu.memory_space<vmem>>) attributes {dimension_semantics = [#tpu.dimension_semantics<parallel>, #tpu.dimension_semantics<parallel>], iteration_bounds = array<i64: 2, 1>, scalar_prefetch = 0 : i64, scratch_operands = 0 : i64, tpu.core_type = #tpu.core_type<tc>, window_params = [{transform_indices = @transform_0, window_bounds = array<i64: 1, 8, 32>}, {transform_indices = @transform_1, window_bounds = array<i64: 1, 8, 32>}, {transform_indices = @transform_2, window_bounds = array<i64: 1, 8, 32>}, {pipeline_mode = #tpu.pipeline_mode<synchronous>, transform_indices = @transform_3, window_bounds = array<i64: 32, 32>}, {pipeline_mode = #tpu.pipeline_mode<synchronous>, transform_indices = @transform_4, window_bounds = array<i64: 32, 32>}, {pipeline_mode = #tpu.pipeline_mode<synchronous>, transform_indices = @transform_5, window_bounds = array<i64: 32, 32>}, {transform_indices = @transform_6, window_bounds = array<i64: 1, 8, 32>}, {transform_indices = @transform_7, window_bounds = array<i64: 1, 8, 32>}, {transform_indices = @transform_8, window_bounds = array<i64: 1, 8, 32>}]} {
    %c0 = arith.constant 0 : index
    %c0_0 = arith.constant 0 : index
    %c0_1 = arith.constant 0 : index
    %0 = vector.load %arg2[%c0, %c0_0, %c0_1] : memref<1x8x32xbf16, #tpu.memory_space<vmem>>, vector<1x8x32xbf16>
    %1 = vector.shape_cast %0 : vector<1x8x32xbf16> to vector<8x32xbf16>
    %c0_2 = arith.constant 0 : index
    %c0_3 = arith.constant 0 : index
    %c0_4 = arith.constant 0 : index
    %2 = vector.load %arg3[%c0_2, %c0_3, %c0_4] : memref<1x8x32xbf16, #tpu.memory_space<vmem>>, vector<1x8x32xbf16>
    %3 = vector.shape_cast %2 : vector<1x8x32xbf16> to vector<8x32xbf16>
    %c0_5 = arith.constant 0 : index
    %c0_6 = arith.constant 0 : index
    %c0_7 = arith.constant 0 : index
    %4 = vector.load %arg4[%c0_5, %c0_6, %c0_7] : memref<1x8x32xbf16, #tpu.memory_space<vmem>>, vector<1x8x32xbf16>
    %5 = vector.shape_cast %4 : vector<1x8x32xbf16> to vector<8x32xbf16>
    %c0_8 = arith.constant 0 : index
    %c0_9 = arith.constant 0 : index
    %6 = vector.load %arg5[%c0_8, %c0_9] : memref<32x32xbf16, #tpu.memory_space<vmem>>, vector<32x32xbf16>
    %cst = arith.constant dense<0.000000e+00> : vector<8x32xf32>
    %7 = tpu.matmul %1, %6, %cst {dimension_numbers = #tpu.dot_dimension_numbers<[1], [0], [0], [1], [0, 0, 1, 1], [], []>} : vector<8x32xbf16>, vector<32x32xbf16>, vector<8x32xf32> -> vector<8x32xf32>
    %c0_10 = arith.constant 0 : index
    %c0_11 = arith.constant 0 : index
    %8 = vector.load %arg6[%c0_10, %c0_11] : memref<32x32xbf16, #tpu.memory_space<vmem>>, vector<32x32xbf16>
    %cst_12 = arith.constant dense<0.000000e+00> : vector<8x32xf32>
    %9 = tpu.matmul %3, %8, %cst_12 {dimension_numbers = #tpu.dot_dimension_numbers<[1], [0], [0], [1], [0, 0, 1, 1], [], []>} : vector<8x32xbf16>, vector<32x32xbf16>, vector<8x32xf32> -> vector<8x32xf32>
    %c0_13 = arith.constant 0 : index
    %c0_14 = arith.constant 0 : index
    %10 = vector.load %arg7[%c0_13, %c0_14] : memref<32x32xbf16, #tpu.memory_space<vmem>>, vector<32x32xbf16>
    %cst_15 = arith.constant dense<0.000000e+00> : vector<8x32xf32>
    %11 = tpu.matmul %5, %10, %cst_15 {dimension_numbers = #tpu.dot_dimension_numbers<[1], [0], [0], [1], [0, 0, 1, 1], [], []>} : vector<8x32xbf16>, vector<32x32xbf16>, vector<8x32xf32> -> vector<8x32xf32>
    %cst_16 = arith.constant 0.353553385 : f32
    %12 = vector.broadcast %cst_16 : f32 to vector<8x32xf32>
    %13 = arith.mulf %7, %12 : vector<8x32xf32>
    %14 = arith.truncf %13 : vector<8x32xf32> to vector<8x32xbf16>
    %c0_17 = arith.constant 0 : index
    %c0_18 = arith.constant 0 : index
    %c0_19 = arith.constant 0 : index
    %15 = vector.load %arg8[%c0_17, %c0_18, %c0_19] : memref<1x8x32xbf16, #tpu.memory_space<vmem>>, vector<1x8x32xbf16>
    %16 = vector.shape_cast %15 : vector<1x8x32xbf16> to vector<8x32xbf16>
    %17 = vector.shape_cast %14 : vector<8x32xbf16> to vector<1x8x32xbf16>
    tpu.vector_store %arg8[%c0_17, %c0_18, %c0_19], %17 {strides = array<i32>} : memref<1x8x32xbf16, #tpu.memory_space<vmem>>, vector<1x8x32xbf16>,
    %18 = arith.truncf %9 : vector<8x32xf32> to vector<8x32xbf16>
    %c0_20 = arith.constant 0 : index
    %c0_21 = arith.constant 0 : index
    %c0_22 = arith.constant 0 : index
    %19 = vector.load %arg9[%c0_20, %c0_21, %c0_22] : memref<1x8x32xbf16, #tpu.memory_space<vmem>>, vector<1x8x32xbf16>
    %20 = vector.shape_cast %19 : vector<1x8x32xbf16> to vector<8x32xbf16>
    %21 = vector.shape_cast %18 : vector<8x32xbf16> to vector<1x8x32xbf16>
    tpu.vector_store %arg9[%c0_20, %c0_21, %c0_22], %21 {strides = array<i32>} : memref<1x8x32xbf16, #tpu.memory_space<vmem>>, vector<1x8x32xbf16>,
    %22 = arith.truncf %11 : vector<8x32xf32> to vector<8x32xbf16>
    %c0_23 = arith.constant 0 : index
    %c0_24 = arith.constant 0 : index
    %c0_25 = arith.constant 0 : index
    %23 = vector.load %arg10[%c0_23, %c0_24, %c0_25] : memref<1x8x32xbf16, #tpu.memory_space<vmem>>, vector<1x8x32xbf16>
    %24 = vector.shape_cast %23 : vector<1x8x32xbf16> to vector<8x32xbf16>
    %25 = vector.shape_cast %22 : vector<8x32xbf16> to vector<1x8x32xbf16>
    tpu.vector_store %arg10[%c0_23, %c0_24, %c0_25], %25 {strides = array<i32>} : memref<1x8x32xbf16, #tpu.memory_space<vmem>>, vector<1x8x32xbf16>,
    return
  }
  func.func @transform_0(%arg0: i32, %arg1: i32) -> (i32, i32, i32) {
    %c0_i32 = arith.constant 0 : i32
    %c0_i32_0 = arith.constant 0 : i32
    return %arg0, %arg1, %c0_i32 : i32, i32, i32
  }
  func.func @transform_1(%arg0: i32, %arg1: i32) -> (i32, i32, i32) {
    %c0_i32 = arith.constant 0 : i32
    %c0_i32_0 = arith.constant 0 : i32
    return %arg0, %arg1, %c0_i32 : i32, i32, i32
  }
  func.func @transform_2(%arg0: i32, %arg1: i32) -> (i32, i32, i32) {
    %c0_i32 = arith.constant 0 : i32
    %c0_i32_0 = arith.constant 0 : i32
    return %arg0, %arg1, %c0_i32 : i32, i32, i32
  }
  func.func @transform_3(%arg0: i32, %arg1: i32) -> (i32, i32) {
    %c0_i32 = arith.constant 0 : i32
    %c0_i32_0 = arith.constant 0 : i32
    %c0_i32_1 = arith.constant 0 : i32
    return %c0_i32, %c0_i32_0 : i32, i32
  }
  func.func @transform_4(%arg0: i32, %arg1: i32) -> (i32, i32) {
    %c0_i32 = arith.constant 0 : i32
    %c0_i32_0 = arith.constant 0 : i32
    %c0_i32_1 = arith.constant 0 : i32
    return %c0_i32, %c0_i32_0 : i32, i32
  }
  func.func @transform_5(%arg0: i32, %arg1: i32) -> (i32, i32) {
    %c0_i32 = arith.constant 0 : i32
    %c0_i32_0 = arith.constant 0 : i32
    %c0_i32_1 = arith.constant 0 : i32
    return %c0_i32, %c0_i32_0 : i32, i32
  }
  func.func @transform_6(%arg0: i32, %arg1: i32) -> (i32, i32, i32) {
    %c0_i32 = arith.constant 0 : i32
    %c0_i32_0 = arith.constant 0 : i32
    return %arg0, %arg1, %c0_i32 : i32, i32, i32
  }
  func.func @transform_7(%arg0: i32, %arg1: i32) -> (i32, i32, i32) {
    %c0_i32 = arith.constant 0 : i32
    %c0_i32_0 = arith.constant 0 : i32
    return %arg0, %arg1, %c0_i32 : i32, i32, i32
  }
  func.func @transform_8(%arg0: i32, %arg1: i32) -> (i32, i32, i32) {
    %c0_i32 = arith.constant 0 : i32
    %c0_i32_0 = arith.constant 0 : i32
    return %arg0, %arg1, %c0_i32 : i32, i32, i32
  }
}

</mosaic_0001>

<llo_original>
// kernel: tpu_custom_call.1
$region0: #{tpu_custom_call.1}
  #allocation0 [shape = 'u32[]', space=smem, size = 0x4, offset = 0x4, fixed_abs, tag = 'smem constant byte address 0x4 - core index']
  #allocation1 [shape = 'u32[144,128]{1,0:T(1,128)}', space=vmem, size = 0x12000, scoped, tag = 'internal scratch']
  %s0 = inlined_call_operand.hbm [shape: bf16[2,8,32], index: 0, kind: input, shape index: {}]
  %s1 = inlined_call_operand.hbm [shape: bf16[2,8,32], index: 1, kind: input, shape index: {}]
  %s2 = inlined_call_operand.hbm [shape: bf16[2,8,32], index: 2, kind: input, shape index: {}]
  %s3 = inlined_call_operand.hbm [shape: bf16[32,32], index: 3, kind: input, shape index: {}]
  %s4 = inlined_call_operand.hbm [shape: bf16[32,32], index: 4, kind: input, shape index: {}]
  %s5 = inlined_call_operand.vmem [shape: bf16[32,32], index: 5, kind: input, shape index: {}]
  %s6 = inlined_call_operand.hbm [shape: bf16[2,8,32], index: 6, kind: output, shape index: {0}]
  %s7 = inlined_call_operand.hbm [shape: bf16[2,8,32], index: 7, kind: output, shape index: {1}]
  %s8 = inlined_call_operand.hbm [shape: bf16[2,8,32], index: 8, kind: output, shape index: {2}]
  %9 = xla_tuple %s6, %s7, %s8
  %s10 = sld [smem:[#allocation0]]
  $region93: #{tpu_custom_call.1} parent=0
    _
  %s12 = ssub.s32 1, %s10
  %s13 = scalar_select 0, %s12, %s10
  $region1: #{tpu_custom_call.1} parent=0
    #allocation2 [shape = 'u8[4096]{0}', space=vmem, size = 0x1000, scoped, tag = 'input window, operand 0']
    #allocation3 [shape = 's32[2]{0}', space=sflag, size = 0x8, scoped, tag = 'scoped memory for tpu_custom_call.1']
    #allocation4 [shape = 's32[2]{0}', space=sflag, size = 0x8, scoped, tag = 'scoped memory for tpu_custom_call.1']
    #allocation5 [shape = 'u8[4096]{0}', space=vmem, size = 0x1000, scoped, tag = 'input window, operand 1']
    #allocation6 [shape = 's32[2]{0}', space=sflag, size = 0x8, scoped, tag = 'scoped memory for tpu_custom_call.1']
    #allocation7 [shape = 'u8[4096]{0}', space=vmem, size = 0x1000, scoped, tag = 'input window, operand 2']
    #allocation8 [shape = 'u8[8192]{0}', space=vmem, size = 0x2000, scoped, tag = 'input window, operand 3, single buffered']
    #allocation9 [shape = 's32[1]{0}', space=sflag, size = 0x4, scoped, tag = 'scoped memory for tpu_custom_call.1']
    #allocation10 [shape = 'u8[8192]{0}', space=vmem, size = 0x2000, scoped, tag = 'input window, operand 4, single buffered']
    #allocation11 [shape = 'u8[4096]{0}', space=vmem, size = 0x1000, scoped, tag = 'output window, operand 0']
    #allocation12 [shape = 'u8[4096]{0}', space=vmem, size = 0x1000, scoped, tag = 'output window, operand 1']
    #allocation13 [shape = 's32[2]{0}', space=sflag, size = 0x8, scoped, tag = 'scoped memory for tpu_custom_call.1']
    #allocation14 [shape = 'u8[4096]{0}', space=vmem, size = 0x1000, scoped, tag = 'output window, operand 2']
    %14 = vsyncpa [#allocation3], 0
    %s15 = scalar_lea.sflag [#allocation3], 1
    %16 = vsyncpa %s15, 0
    %17 = vsyncpa [#allocation6], 0
    %s18 = scalar_lea.sflag [#allocation6], 1
    %19 = vsyncpa %s18, 0
    %20 = vsyncpa [#allocation9], 0
    %21 = vsyncpa [#allocation4], 0
    %s22 = scalar_lea.sflag [#allocation4], 1
    %23 = vsyncpa %s22, 0
    %24 = vsyncpa [#allocation13], 0
    %s25 = scalar_lea.sflag [#allocation13], 1
    %26 = vsyncpa %s25, 0
    loop: start=0, step=1, limit=4
    $region2: #{tpu_custom_call.1} parent=1 // loop_pre_header
      _
    $region3: #{tpu_custom_call.1} parent=1 // loop_header
      %s28 = sphi 0, %s32
      %p29 = scmp.ge.s32.totalorder %s28, 4
      %s35 = sphi 0, %s47
      %s36 = sphi 0, %s43
      %s37 = sphi 0, %s35
      %s38 = sphi 0, %s36
      %s39 = sphi 0, %s37
      %s40 = sphi 0, %s38
      %s52 = sphi 0, %s54
      %s55 = sphi 0, %s52
      %s56 = sphi 0, %s55
      %s72 = sphi 0, %s56
      %s80 = sphi 0, %s82
      %s83 = sphi 0, %s80
      %s84 = sphi 0, %s83
      %s100 = sphi 0, %s84
      %s108 = sphi 0, %s110
      %s111 = sphi 0, %s108
      %s112 = sphi 0, %s111
      %s128 = sphi 0, %s112
      %s132 = sphi 0, %s132
      %s134 = sphi 0, %s132
      %s135 = sphi 0, %s134
      %s149 = sphi 0, %s135
      %s153 = sphi 0, %s153
      %s155 = sphi 0, %s153
      %s156 = sphi 0, %s155
      %s170 = sphi 0, %s156
      %s174 = sphi 0, %s174
      %s176 = sphi 0, %s174
      %s177 = sphi 0, %s176
      %s191 = sphi 0, %s177
      %s199 = sphi 0, %s201
      %s202 = sphi 0, %s199
      %s203 = sphi 0, %s202
      %s219 = sphi 0, %s203
      %s227 = sphi 0, %s229
      %s230 = sphi 0, %s227
      %s231 = sphi 0, %s230
      %s247 = sphi 0, %s231
      %s255 = sphi 0, %s257
      %s258 = sphi 0, %s255
      %s259 = sphi 0, %s258
      %s275 = sphi 0, %s259
    $region4: #{tpu_custom_call.1} parent=1 // loop_header_branch
      %31 = sbr.rel (%p29) target = $region8
    $region5: #{tpu_custom_call.1} parent=1 // loop_body
      %s33 = ssub.s32 %s28, 1
      %s34 = ssub.s32 %s28, 2
      %s41 = sadd.s32 1, %s36
      %p42 = scmp.ge.s32.totalorder %s41, 1
      %s43 = scalar_select %p42, 0, %s41
      %s44 = sadd.s32 1, %s35
      %s45 = scalar_select %p42, %s44, %s35
      %p46 = scmp.ge.s32.totalorder %s45, 2
      %s47 = scalar_select %p46, 0, %s45
      %s48 = ssub.s32 %s35, %s47
      %s49 = ssub.s32 %s36, %s43
      %s50 = sor.u32 %s48, %s49
      %p51 = scmp.eq.s32.totalorder %s50, 0
      %s53 = sadd.s32 %s52, 1
      %s54 = scalar_select %p51, %s52, %s53
      %p57 = pneg %p51
      %p58 = scmp.eq.s32.totalorder %s28, 1
      %p59 = por %p57, %p58
      %p60 = scmp.ne.s32.totalorder %s52, %s55
      %p61 = scmp.eq.s32.totalorder %s28, 0
      %p62 = por %p60, %p61
      %p63 = scmp.ne.s32.totalorder %s52, %s55
      %p64 = scmp.eq.s32.totalorder %s33, 1
      %p65 = por %p63, %p64
      %p66 = scmp.ne.s32.totalorder %s55, %s56
      %p67 = scmp.eq.s32.totalorder %s33, 0
      %p68 = por %p66, %p67
      %p69 = scmp.ne.s32.totalorder %s55, %s56
      %p70 = scmp.eq.s32.totalorder %s34, 1
      %p71 = por %p69, %p70
      %p73 = scmp.ne.s32.totalorder %s56, %s72
      %p74 = scmp.eq.s32.totalorder %s34, 0
      %p75 = por %p73, %p74
      %s76 = ssub.s32 %s35, %s47
      %s77 = ssub.s32 %s36, %s43
      %s78 = sor.u32 %s76, %s77
      %p79 = scmp.eq.s32.totalorder %s78, 0
      %s81 = sadd.s32 %s80, 1
      %s82 = scalar_select %p79, %s80, %s81
      %p85 = pneg %p79
      %p86 = scmp.eq.s32.totalorder %s28, 1
      %p87 = por %p85, %p86
      %p88 = scmp.ne.s32.totalorder %s80, %s83
      %p89 = scmp.eq.s32.totalorder %s28, 0
      %p90 = por %p88, %p89
      %p91 = scmp.ne.s32.totalorder %s80, %s83
      %p92 = scmp.eq.s32.totalorder %s33, 1
      %p93 = por %p91, %p92
      %p94 = scmp.ne.s32.totalorder %s83, %s84
      %p95 = scmp.eq.s32.totalorder %s33, 0
      %p96 = por %p94, %p95
      %p97 = scmp.ne.s32.totalorder %s83, %s84
      %p98 = scmp.eq.s32.totalorder %s34, 1
      %p99 = por %p97, %p98
      %p101 = scmp.ne.s32.totalorder %s84, %s100
      %p102 = scmp.eq.s32.totalorder %s34, 0
      %p103 = por %p101, %p102
      %s104 = ssub.s32 %s35, %s47
      %s105 = ssub.s32 %s36, %s43
      %s106 = sor.u32 %s104, %s105
      %p107 = scmp.eq.s32.totalorder %s106, 0
      %s109 = sadd.s32 %s108, 1
      %s110 = scalar_select %p107, %s108, %s109
      %p113 = pneg %p107
      %p114 = scmp.eq.s32.totalorder %s28, 1
      %p115 = por %p113, %p114
      %p116 = scmp.ne.s32.totalorder %s108, %s111
      %p117 = scmp.eq.s32.totalorder %s28, 0
      %p118 = por %p116, %p117
      %p119 = scmp.ne.s32.totalorder %s108, %s111
      %p120 = scmp.eq.s32.totalorder %s33, 1
      %p121 = por %p119, %p120
      %p122 = scmp.ne.s32.totalorder %s111, %s112
      %p123 = scmp.eq.s32.totalorder %s33, 0
      %p124 = por %p122, %p123
      %p125 = scmp.ne.s32.totalorder %s111, %s112
      %p126 = scmp.eq.s32.totalorder %s34, 1
      %p127 = por %p125, %p126
      %p129 = scmp.ne.s32.totalorder %s112, %s128
      %p130 = scmp.eq.s32.totalorder %s34, 0
      %p131 = por %p129, %p130
      %s133 = sadd.s32 %s132, 1
      %p136 = scmp.eq.s32.totalorder %s28, 1
      %p137 = scmp.ne.s32.totalorder %s132, %s134
      %p138 = scmp.eq.s32.totalorder %s28, 0
      %p139 = por %p137, %p138
      %p140 = scmp.ne.s32.totalorder %s132, %s134
      %p141 = scmp.eq.s32.totalorder %s33, 1
      %p142 = por %p140, %p141
      %p143 = scmp.ne.s32.totalorder %s134, %s135
      %p144 = scmp.eq.s32.totalorder %s33, 0
      %p145 = por %p143, %p144
      %p146 = scmp.ne.s32.totalorder %s134, %s135
      %p147 = scmp.eq.s32.totalorder %s34, 1
      %p148 = por %p146, %p147
      %p150 = scmp.ne.s32.totalorder %s135, %s149
      %p151 = scmp.eq.s32.totalorder %s34, 0
      %p152 = por %p150, %p151
      %s154 = sadd.s32 %s153, 1
      %p157 = scmp.eq.s32.totalorder %s28, 1
      %p158 = scmp.ne.s32.totalorder %s153, %s155
      %p159 = scmp.eq.s32.totalorder %s28, 0
      %p160 = por %p158, %p159
      %p161 = scmp.ne.s32.totalorder %s153, %s155
      %p162 = scmp.eq.s32.totalorder %s33, 1
      %p163 = por %p161, %p162
      %p164 = scmp.ne.s32.totalorder %s155, %s156
      %p165 = scmp.eq.s32.totalorder %s33, 0
      %p166 = por %p164, %p165
      %p167 = scmp.ne.s32.totalorder %s155, %s156
      %p168 = scmp.eq.s32.totalorder %s34, 1
      %p169 = por %p167, %p168
      %p171 = scmp.ne.s32.totalorder %s156, %s170
      %p172 = scmp.eq.s32.totalorder %s34, 0
      %p173 = por %p171, %p172
      %s175 = sadd.s32 %s174, 1
      %p178 = scmp.eq.s32.totalorder %s28, 1
      %p179 = scmp.ne.s32.totalorder %s174, %s176
      %p180 = scmp.eq.s32.totalorder %s28, 0
      %p181 = por %p179, %p180
      %p182 = scmp.ne.s32.totalorder %s174, %s176
      %p183 = scmp.eq.s32.totalorder %s33, 1
      %p184 = por %p182, %p183
      %p185 = scmp.ne.s32.totalorder %s176, %s177
      %p186 = scmp.eq.s32.totalorder %s33, 0
      %p187 = por %p185, %p186
      %p188 = scmp.ne.s32.totalorder %s176, %s177
      %p189 = scmp.eq.s32.totalorder %s34, 1
      %p190 = por %p188, %p189
      %p192 = scmp.ne.s32.totalorder %s177, %s191
      %p193 = scmp.eq.s32.totalorder %s34, 0
      %p194 = por %p192, %p193
      %s195 = ssub.s32 %s35, %s47
      %s196 = ssub.s32 %s36, %s43
      %s197 = sor.u32 %s195, %s196
      %p198 = scmp.eq.s32.totalorder %s197, 0
      %s200 = sadd.s32 %s199, 1
      %s201 = scalar_select %p198, %s199, %s200
      %p204 = pneg %p198
      %p205 = scmp.eq.s32.totalorder %s28, 1
      %p206 = por %p204, %p205
      %p207 = scmp.ne.s32.totalorder %s199, %s202
      %p208 = scmp.eq.s32.totalorder %s28, 0
      %p209 = por %p207, %p208
      %p210 = scmp.ne.s32.totalorder %s199, %s202
      %p211 = scmp.eq.s32.totalorder %s33, 1
      %p212 = por %p210, %p211
      %p213 = scmp.ne.s32.totalorder %s202, %s203
      %p214 = scmp.eq.s32.totalorder %s33, 0
      %p215 = por %p213, %p214
      %p216 = scmp.ne.s32.totalorder %s202, %s203
      %p217 = scmp.eq.s32.totalorder %s34, 1
      %p218 = por %p216, %p217
      %p220 = scmp.ne.s32.totalorder %s203, %s219
      %p221 = scmp.eq.s32.totalorder %s34, 0
      %p222 = por %p220, %p221
      %s223 = ssub.s32 %s35, %s47
      %s224 = ssub.s32 %s36, %s43
      %s225 = sor.u32 %s223, %s224
      %p226 = scmp.eq.s32.totalorder %s225, 0
      %s228 = sadd.s32 %s227, 1
      %s229 = scalar_select %p226, %s227, %s228
      %p232 = pneg %p226
      %p233 = scmp.eq.s32.totalorder %s28, 1
      %p234 = por %p232, %p233
      %p235 = scmp.ne.s32.totalorder %s227, %s230
      %p236 = scmp.eq.s32.totalorder %s28, 0
      %p237 = por %p235, %p236
      %p238 = scmp.ne.s32.totalorder %s227, %s230
      %p239 = scmp.eq.s32.totalorder %s33, 1
      %p240 = por %p238, %p239
      %p241 = scmp.ne.s32.totalorder %s230, %s231
      %p242 = scmp.eq.s32.totalorder %s33, 0
      %p243 = por %p241, %p242
      %p244 = scmp.ne.s32.totalorder %s230, %s231
      %p245 = scmp.eq.s32.totalorder %s34, 1
      %p246 = por %p244, %p245
      %p248 = scmp.ne.s32.totalorder %s231, %s247
      %p249 = scmp.eq.s32.totalorder %s34, 0
      %p250 = por %p248, %p249
      %s251 = ssub.s32 %s35, %s47
      %s252 = ssub.s32 %s36, %s43
      %s253 = sor.u32 %s251, %s252
      %p254 = scmp.eq.s32.totalorder %s253, 0
      %s256 = sadd.s32 %s255, 1
      %s257 = scalar_select %p254, %s255, %s256
      %p260 = pneg %p254
      %p261 = scmp.eq.s32.totalorder %s28, 1
      %p262 = por %p260, %p261
      %p263 = scmp.ne.s32.totalorder %s255, %s258
      %p264 = scmp.eq.s32.totalorder %s28, 0
      %p265 = por %p263, %p264
      %p266 = scmp.ne.s32.totalorder %s255, %s258
      %p267 = scmp.eq.s32.totalorder %s33, 1
      %p268 = por %p266, %p267
      %p269 = scmp.ne.s32.totalorder %s258, %s259
      %p270 = scmp.eq.s32.totalorder %s33, 0
      %p271 = por %p269, %p270
      %p272 = scmp.ne.s32.totalorder %s258, %s259
      %p273 = scmp.eq.s32.totalorder %s34, 1
      %p274 = por %p272, %p273
      %p276 = scmp.ne.s32.totalorder %s259, %s275
      %p277 = scmp.eq.s32.totalorder %s34, 0
      %p278 = por %p276, %p277
      %p279 = scmp.le.s32.totalorder 1, %s28
      %p280 = scmp.lt.s32.totalorder %s28, 3
      %p281 = pnand %p279, %p280
      %p282 = pneg %p281
      // Predicated region
      $region9: #{tpu_custom_call.1} parent=5 // pred_check
        _
      $region10: #{tpu_custom_call.1} parent=5 // pred_check_branch
        %284 = sbr.rel (%p281) target = $region12
      $region11: #{tpu_custom_call.1} parent=5 // pred_region
        %s285 = ssub.s32 %s28, 1
        // Predicated region
        $region13: #{tpu_custom_call.1} parent=11 // pred_check
          %p286 = pneg %p145
        $region14: #{tpu_custom_call.1} parent=11 // pred_check_branch
          %288 = sbr.rel (%p286) target = $region16
        $region15: #{tpu_custom_call.1} parent=11 // pred_region
          %s290 = ssub.s32 256, 256
          %291 = vsyncadd [#allocation9], %s290
          %s292 = sshll.u32 [#allocation8], 4
          %s293 = int_to_ptr.vmem [resolvable:$true] %s292
          %298 = dma.hbm_to_vmem [thread:$0]  %s3, 256, %s293, [#allocation9], 64, 64, 4
        $region16: #{tpu_custom_call.1} parent=11 // pred_fallthru
          _
        // Predicated region
        $region17: #{tpu_custom_call.1} parent=11 // pred_check
          %p299 = pneg %p166
        $region18: #{tpu_custom_call.1} parent=11 // pred_check_branch
          %301 = sbr.rel (%p299) target = $region20
        $region19: #{tpu_custom_call.1} parent=11 // pred_region
          %s303 = ssub.s32 256, 256
          %304 = vsyncadd [#allocation9], %s303
          %s305 = sshll.u32 [#allocation10], 4
          %s306 = int_to_ptr.vmem [resolvable:$true] %s305
          %311 = dma.hbm_to_vmem [thread:$0]  %s4, 256, %s306, [#allocation9], 64, 64, 4
        $region20: #{tpu_custom_call.1} parent=11 // pred_fallthru
          _
        // Predicated region
        $region21: #{tpu_custom_call.1} parent=11 // pred_check
          %p312 = pneg %p187
        $region22: #{tpu_custom_call.1} parent=11 // pred_check_branch
          %314 = sbr.rel (%p312) target = $region24
        $region23: #{tpu_custom_call.1} parent=11 // pred_region
          _
        $region24: #{tpu_custom_call.1} parent=11 // pred_fallthru
          _
      $region12: #{tpu_custom_call.1} parent=5 // pred_fallthru
        _
      %p315 = scmp.lt.s32.totalorder %s28, 2
      // Predicated region
      $region25: #{tpu_custom_call.1} parent=5 // pred_check
        %p316 = pneg %p315
      $region26: #{tpu_custom_call.1} parent=5 // pred_check_branch
        %318 = sbr.rel (%p316) target = $region28
      $region27: #{tpu_custom_call.1} parent=5 // pred_region
        // Predicated region
        $region29: #{tpu_custom_call.1} parent=27 // pred_check
          %p319 = pneg %p62
        $region30: #{tpu_custom_call.1} parent=27 // pred_check_branch
          %321 = sbr.rel (%p319) target = $region32
        $region31: #{tpu_custom_call.1} parent=27 // pred_region
          %s322 = sand.u32 %s52, 1
          %s323 = scalar_lea.sflag [#allocation3], %s322
          %s324 = sand.u32 %s52, 1
          %s325 = smul.addr %s324, 4
          %s326 = scalar_lea.vmem [#allocation2], %s325
          %s328 = ssub.s32 64, 64
          %329 = vsyncadd %s323, %s328
          %s330 = sadd.s32 %s36, %s35
          %s331 = smul.addr %s330, 64
          %s332 = scalar_lea.hbm %s0, %s331
          %s334 = sshll.u32 %s326, 4
          %s335 = int_to_ptr.vmem [resolvable:$true] %s334
          %337 = dma.hbm_to_vmem [thread:$0]  %s332, 64, %s335, %s323
        $region32: #{tpu_custom_call.1} parent=27 // pred_fallthru
          _
        // Predicated region
        $region33: #{tpu_custom_call.1} parent=27 // pred_check
          %p338 = pneg %p90
        $region34: #{tpu_custom_call.1} parent=27 // pred_check_branch
          %340 = sbr.rel (%p338) target = $region36
        $region35: #{tpu_custom_call.1} parent=27 // pred_region
          %s341 = sand.u32 %s28, 1
          %s342 = scalar_lea.sflag [#allocation6], %s341
          %s343 = sand.u32 %s80, 1
          %s344 = smul.addr %s343, 4
          %s345 = scalar_lea.vmem [#allocation5], %s344
          %s347 = ssub.s32 64, 64
          %348 = vsyncadd %s342, %s347
          %s349 = sadd.s32 %s36, %s35
          %s350 = smul.addr %s349, 64
          %s351 = scalar_lea.hbm %s1, %s350
          %s353 = sshll.u32 %s345, 4
          %s354 = int_to_ptr.vmem [resolvable:$true] %s353
          %356 = dma.hbm_to_vmem [thread:$0]  %s351, 64, %s354, %s342
        $region36: #{tpu_custom_call.1} parent=27 // pred_fallthru
          _
        // Predicated region
        $region37: #{tpu_custom_call.1} parent=27 // pred_check
          %p357 = pneg %p118
        $region38: #{tpu_custom_call.1} parent=27 // pred_check_branch
          %359 = sbr.rel (%p357) target = $region40
        $region39: #{tpu_custom_call.1} parent=27 // pred_region
          %s360 = sand.u32 %s28, 1
          %s361 = scalar_lea.sflag [#allocation6], %s360
          %s362 = sand.u32 %s108, 1
          %s363 = smul.addr %s362, 4
          %s364 = scalar_lea.vmem [#allocation7], %s363
          %s366 = ssub.s32 64, 64
          %367 = vsyncadd %s361, %s366
          %s368 = sadd.s32 %s36, %s35
          %s369 = smul.addr %s368, 64
          %s370 = scalar_lea.hbm %s2, %s369
          %s372 = sshll.u32 %s364, 4
          %s373 = int_to_ptr.vmem [resolvable:$true] %s372
          %375 = dma.hbm_to_vmem [thread:$0]  %s370, 64, %s373, %s361
        $region40: #{tpu_custom_call.1} parent=27 // pred_fallthru
          _
      $region28: #{tpu_custom_call.1} parent=5 // pred_fallthru
        _
      %p376 = scmp.le.s32.totalorder 1, %s28
      %p377 = scmp.lt.s32.totalorder %s28, 3
      %p378 = pnand %p376, %p377
      %p379 = pneg %p378
      // Predicated region
      $region41: #{tpu_custom_call.1} parent=5 // pred_check
        _
      $region42: #{tpu_custom_call.1} parent=5 // pred_check_branch
        %381 = sbr.rel (%p378) target = $region44
      $region43: #{tpu_custom_call.1} parent=5 // pred_region
        %s382 = ssub.s32 %s28, 1
        %s383 = sand.u32 %s55, 1
        %s384 = scalar_lea.sflag [#allocation3], %s383
        %s385 = sand.u32 %s55, 1
        %s386 = smul.addr %s385, 4
        %s387 = scalar_lea.vmem [#allocation2], %s386
        // Predicated region
        $region45: #{tpu_custom_call.1} parent=43 // pred_check
          %p388 = pneg %p68
        $region46: #{tpu_custom_call.1} parent=43 // pred_check_branch
          %390 = sbr.rel (%p388) target = $region48
        $region47: #{tpu_custom_call.1} parent=43 // pred_region
          %391 = dma.done %s384, 64
        $region48: #{tpu_custom_call.1} parent=43 // pred_fallthru
          _
        %s392 = sand.u32 %s33, 1
        %s393 = scalar_lea.sflag [#allocation6], %s392
        %s394 = sand.u32 %s83, 1
        %s395 = smul.addr %s394, 4
        %s396 = scalar_lea.vmem [#allocation5], %s395
        // Predicated region
        $region49: #{tpu_custom_call.1} parent=43 // pred_check
          %p397 = pneg %p96
        $region50: #{tpu_custom_call.1} parent=43 // pred_check_branch
          %399 = sbr.rel (%p397) target = $region52
        $region51: #{tpu_custom_call.1} parent=43 // pred_region
          %400 = dma.done %s393, 64
        $region52: #{tpu_custom_call.1} parent=43 // pred_fallthru
          _
        %s401 = sand.u32 %s33, 1
        %s402 = scalar_lea.sflag [#allocation6], %s401
        %s403 = sand.u32 %s111, 1
        %s404 = smul.addr %s403, 4
        %s405 = scalar_lea.vmem [#allocation7], %s404
        // Predicated region
        $region53: #{tpu_custom_call.1} parent=43 // pred_check
          %p406 = pneg %p124
        $region54: #{tpu_custom_call.1} parent=43 // pred_check_branch
          %408 = sbr.rel (%p406) target = $region56
        $region55: #{tpu_custom_call.1} parent=43 // pred_region
          %409 = dma.done %s402, 64
        $region56: #{tpu_custom_call.1} parent=43 // pred_fallthru
          _
        // Predicated region
        $region57: #{tpu_custom_call.1} parent=43 // pred_check
          %p410 = pneg %p145
        $region58: #{tpu_custom_call.1} parent=43 // pred_check_branch
          %412 = sbr.rel (%p410) target = $region60
        $region59: #{tpu_custom_call.1} parent=43 // pred_region
          %413 = dma.done [#allocation9], 256
        $region60: #{tpu_custom_call.1} parent=43 // pred_fallthru
          _
        // Predicated region
        $region61: #{tpu_custom_call.1} parent=43 // pred_check
          %p414 = pneg %p166
        $region62: #{tpu_custom_call.1} parent=43 // pred_check_branch
          %416 = sbr.rel (%p414) target = $region64
        $region63: #{tpu_custom_call.1} parent=43 // pred_region
          %417 = dma.done [#allocation9], 256
        $region64: #{tpu_custom_call.1} parent=43 // pred_fallthru
          _
        %s418 = sand.u32 %s55, 1
        %s419 = scalar_lea.sflag [#allocation3], %s418
        %s420 = sand.u32 %s55, 1
        %s421 = smul.addr %s420, 4
        %s422 = scalar_lea.vmem [#allocation2], %s421
        %p423 = pneg %p68
        %p424 = pneg %p65
        %s425 = sand.u32 %s33, 1
        %s426 = scalar_lea.sflag [#allocation6], %s425
        %s427 = sand.u32 %s83, 1
        %s428 = smul.addr %s427, 4
        %s429 = scalar_lea.vmem [#allocation5], %s428
        %p430 = pneg %p96
        %p431 = pneg %p93
        %s432 = sand.u32 %s33, 1
        %s433 = scalar_lea.sflag [#allocation6], %s432
        %s434 = sand.u32 %s111, 1
        %s435 = smul.addr %s434, 4
        %s436 = scalar_lea.vmem [#allocation7], %s435
        %p437 = pneg %p124
        %p438 = pneg %p121
        %p439 = pneg %p145
        %p440 = pneg %p142
        %p441 = pneg %p166
        %p442 = pneg %p163
        %p443 = pneg %p187
        %p444 = pneg %p184
        %p445 = pneg %p215
        %p446 = pneg %p212
        %s447 = sand.u32 %s202, 1
        %s448 = scalar_lea.sflag [#allocation4], %s447
        %s449 = sand.u32 %s202, 1
        %s450 = smul.addr %s449, 4
        %s451 = scalar_lea.vmem [#allocation11], %s450
        %p452 = pneg %p243
        %p453 = pneg %p240
        %s454 = sand.u32 %s33, 1
        %s455 = scalar_lea.sflag [#allocation13], %s454
        %s456 = sand.u32 %s230, 1
        %s457 = smul.addr %s456, 4
        %s458 = scalar_lea.vmem [#allocation12], %s457
        %p459 = pneg %p271
        %p460 = pneg %p268
        %s461 = sand.u32 %s33, 1
        %s462 = scalar_lea.sflag [#allocation13], %s461
        %s463 = sand.u32 %s258, 1
        %s464 = smul.addr %s463, 4
        %s465 = scalar_lea.vmem [#allocation14], %s464
        %v467 = vld [vmem:[%s387] sm:$0xf]
        %v468 = vld [vmem:[%s396] sm:$0xf]
        %v469 = vld [vmem:[%s405] sm:$0xf]
        %v470 = vld [vmem:[#allocation8] sm:$0xf]
        %v471 = vld [vmem:[#allocation8 + $0x4] sm:$0xf]
        %v472 = vld [vmem:[#allocation8 + $0x8] sm:$0xf]
        %v473 = vld [vmem:[#allocation8 + $0xc] sm:$0xf]
        %v478 = vunpack.c.l.b16 %v470
        %v479 = vunpack.c.l.b16 %v471
        %v480 = vunpack.c.l.b16 %v472
        %v481 = vunpack.c.l.b16 %v473
        %v482 = vpack.c.b16 %v479, %v478
        %v483 = vpack.c.b16 %v481, %v480
        %vm486 = vcmask 261120
        %v488 = vsel %vm486, %v467, 0
        %490 = vmatprep.subr.bf16.mxu0 0
        %491 = vmatpush1.bf16.msra.mxu0 %v482
        %492 = vmatprep.subr.bf16.mxu0 0
        %493 = vmatpush1.bf16.msra.mxu0 %v483
        %494 = vmatprep.subr.bf16.mxu0 0
        %495 = vmatpush1.bf16.msra.mxu0 0
        %496 = vmatprep.subr.bf16.mxu0 0
        %497 = vmatpush1.bf16.msra.mxu0 0
        %498 = vmatprep.subr.bf16.mxu0 0
        %499 = vmatpush1.bf16.msra.mxu0 0
        %500 = vmatprep.subr.bf16.mxu0 0
        %501 = vmatpush1.bf16.msra.mxu0 0
        %502 = vmatprep.subr.bf16.mxu0 0
        %503 = vmatpush1.bf16.msra.mxu0 0
        %504 = vmatprep.subr.bf16.mxu0 0
        %505 = vmatpush1.bf16.msra.mxu0 0
        %506 = vmatprep.subr.bf16.mxu0 0
        %507 = vmatpush1.bf16.msra.mxu0 0
        %508 = vmatprep.subr.bf16.mxu0 0
        %509 = vmatpush1.bf16.msra.mxu0 0
        %510 = vmatprep.subr.bf16.mxu0 0
        %511 = vmatpush1.bf16.msra.mxu0 0
        %512 = vmatprep.subr.bf16.mxu0 0
        %513 = vmatpush1.bf16.msra.mxu0 0
        %514 = vmatprep.subr.bf16.mxu0 0
        %515 = vmatpush1.bf16.msra.mxu0 0
        %516 = vmatprep.subr.bf16.mxu0 0
        %517 = vmatpush1.bf16.msra.mxu0 0
        %518 = vmatprep.subr.bf16.mxu0 0
        %519 = vmatpush1.bf16.msra.mxu0 0
        %520 = vmatprep.subr.bf16.mxu0 0
        %521 = vmatpush1.bf16.msra.mxu0 0
        %522 = vmatprep.mubr.bf16.mxu0 0
        %523 = vmatmul.mubr.bf16.gmra.mrb[0].mxu0 %v488
        %v524 = vpop.f32.mrb[0].mxu0
        %v525 = vadd.f32 0.0, %v524
        %v526 = vpop.f32.mrb[0].mxu0
        %v527 = vpop.f32.mrb[0].mxu0
        %v528 = vpop.f32.mrb[0].mxu0
        %529 = vdwg.mxu0
        %v530 = vld [vmem:[#allocation10] sm:$0xf]
        %v531 = vld [vmem:[#allocation10 + $0x4] sm:$0xf]
        %v532 = vld [vmem:[#allocation10 + $0x8] sm:$0xf]
        %v533 = vld [vmem:[#allocation10 + $0xc] sm:$0xf]
        %v538 = vunpack.c.l.b16 %v530
        %v539 = vunpack.c.l.b16 %v531
        %v540 = vunpack.c.l.b16 %v532
        %v541 = vunpack.c.l.b16 %v533
        %v542 = vpack.c.b16 %v539, %v538
        %v543 = vpack.c.b16 %v541, %v540
        %v547 = vsel %vm486, %v468, 0
        %549 = vmatprep.subr.bf16.mxu0 0
        %550 = vmatpush1.bf16.msra.mxu0 %v542
        %551 = vmatprep.subr.bf16.mxu0 0
        %552 = vmatpush1.bf16.msra.mxu0 %v543
        %553 = vmatprep.subr.bf16.mxu0 0
        %554 = vmatpush1.bf16.msra.mxu0 0
        %555 = vmatprep.subr.bf16.mxu0 0
        %556 = vmatpush1.bf16.msra.mxu0 0
        %557 = vmatprep.subr.bf16.mxu0 0
        %558 = vmatpush1.bf16.msra.mxu0 0
        %559 = vmatprep.subr.bf16.mxu0 0
        %560 = vmatpush1.bf16.msra.mxu0 0
        %561 = vmatprep.subr.bf16.mxu0 0
        %562 = vmatpush1.bf16.msra.mxu0 0
        %563 = vmatprep.subr.bf16.mxu0 0
        %564 = vmatpush1.bf16.msra.mxu0 0
        %565 = vmatprep.subr.bf16.mxu0 0
        %566 = vmatpush1.bf16.msra.mxu0 0
        %567 = vmatprep.subr.bf16.mxu0 0
        %568 = vmatpush1.bf16.msra.mxu0 0
        %569 = vmatprep.subr.bf16.mxu0 0
        %570 = vmatpush1.bf16.msra.mxu0 0
        %571 = vmatprep.subr.bf16.mxu0 0
        %572 = vmatpush1.bf16.msra.mxu0 0
        %573 = vmatprep.subr.bf16.mxu0 0
        %574 = vmatpush1.bf16.msra.mxu0 0
        %575 = vmatprep.subr.bf16.mxu0 0
        %576 = vmatpush1.bf16.msra.mxu0 0
        %577 = vmatprep.subr.bf16.mxu0 0
        %578 = vmatpush1.bf16.msra.mxu0 0
        %579 = vmatprep.subr.bf16.mxu0 0
        %580 = vmatpush1.bf16.msra.mxu0 0
        %581 = vmatprep.mubr.bf16.mxu0 0
        %582 = vmatmul.mubr.bf16.gmra.mrb[0].mxu0 %v547
        %v583 = vpop.f32.mrb[0].mxu0
        %v584 = vadd.f32 0.0, %v583
        %v585 = vpop.f32.mrb[0].mxu0
        %v586 = vpop.f32.mrb[0].mxu0
        %v587 = vpop.f32.mrb[0].mxu0
        %588 = vdwg.mxu0
        %v589 = vld [vmem:[%s5] sm:$0xf]
        %v590 = vld [vmem:[%s5 + $0x4] sm:$0xf]
        %v591 = vld [vmem:[%s5 + $0x8] sm:$0xf]
        %v592 = vld [vmem:[%s5 + $0xc] sm:$0xf]
        %v597 = vunpack.c.l.b16 %v589
        %v598 = vunpack.c.l.b16 %v590
        %v599 = vunpack.c.l.b16 %v591
        %v600 = vunpack.c.l.b16 %v592
        %v601 = vpack.c.b16 %v598, %v597
        %v602 = vpack.c.b16 %v600, %v599
        %v606 = vsel %vm486, %v469, 0
        %608 = vmatprep.subr.bf16.mxu0 0
        %609 = vmatpush1.bf16.msra.mxu0 %v601
        %610 = vmatprep.subr.bf16.mxu0 0
        %611 = vmatpush1.bf16.msra.mxu0 %v602
        %612 = vmatprep.subr.bf16.mxu0 0
        %613 = vmatpush1.bf16.msra.mxu0 0
        %614 = vmatprep.subr.bf16.mxu0 0
        %615 = vmatpush1.bf16.msra.mxu0 0
        %616 = vmatprep.subr.bf16.mxu0 0
        %617 = vmatpush1.bf16.msra.mxu0 0
        %618 = vmatprep.subr.bf16.mxu0 0
        %619 = vmatpush1.bf16.msra.mxu0 0
        %620 = vmatprep.subr.bf16.mxu0 0
        %621 = vmatpush1.bf16.msra.mxu0 0
        %622 = vmatprep.subr.bf16.mxu0 0
        %623 = vmatpush1.bf16.msra.mxu0 0
        %624 = vmatprep.subr.bf16.mxu0 0
        %625 = vmatpush1.bf16.msra.mxu0 0
        %626 = vmatprep.subr.bf16.mxu0 0
        %627 = vmatpush1.bf16.msra.mxu0 0
        %628 = vmatprep.subr.bf16.mxu0 0
        %629 = vmatpush1.bf16.msra.mxu0 0
        %630 = vmatprep.subr.bf16.mxu0 0
        %631 = vmatpush1.bf16.msra.mxu0 0
        %632 = vmatprep.subr.bf16.mxu0 0
        %633 = vmatpush1.bf16.msra.mxu0 0
        %634 = vmatprep.subr.bf16.mxu0 0
        %635 = vmatpush1.bf16.msra.mxu0 0
        %636 = vmatprep.subr.bf16.mxu0 0
        %637 = vmatpush1.bf16.msra.mxu0 0
        %638 = vmatprep.subr.bf16.mxu0 0
        %639 = vmatpush1.bf16.msra.mxu0 0
        %640 = vmatprep.mubr.bf16.mxu0 0
        %641 = vmatmul.mubr.bf16.gmra.mrb[0].mxu0 %v606
        %v642 = vpop.f32.mrb[0].mxu0
        %v643 = vadd.f32 0.0, %v642
        %v644 = vpop.f32.mrb[0].mxu0
        %v645 = vpop.f32.mrb[0].mxu0
        %v646 = vpop.f32.mrb[0].mxu0
        %647 = vdwg.mxu0
        %v648 = vmul.f32 %v525, 0.35355338
        %v649 = vpack.c.bf16 %v648, %v648
        %vm650 = vcmask 257024
        %651 = vst.msk [vmem:[%s451] sm:$0xf] %vm650, %v649
        %v652 = vpack.c.bf16 %v584, %v584
        %653 = vst.msk [vmem:[%s458] sm:$0xf] %vm650, %v652
        %v654 = vpack.c.bf16 %v643, %v643
        %655 = vst.msk [vmem:[%s465] sm:$0xf] %vm650, %v654
        %s656 = sand.u32 %s202, 1
        %s657 = scalar_lea.sflag [#allocation4], %s656
        %s658 = sand.u32 %s202, 1
        %s659 = smul.addr %s658, 4
        %s660 = scalar_lea.vmem [#allocation11], %s659
        %s661 = sand.u32 %s33, 1
        %s662 = scalar_lea.sflag [#allocation13], %s661
        %s663 = sand.u32 %s230, 1
        %s664 = smul.addr %s663, 4
        %s665 = scalar_lea.vmem [#allocation12], %s664
        %s666 = sand.u32 %s33, 1
        %s667 = scalar_lea.sflag [#allocation13], %s666
        %s668 = sand.u32 %s258, 1
        %s669 = smul.addr %s668, 4
        %s670 = scalar_lea.vmem [#allocation14], %s669
        // Predicated region
        $region65: #{tpu_custom_call.1} parent=43 // pred_check
          %p671 = pneg %p212
        $region66: #{tpu_custom_call.1} parent=43 // pred_check_branch
          %673 = sbr.rel (%p671) target = $region68
        $region67: #{tpu_custom_call.1} parent=43 // pred_region
          %s675 = ssub.s32 64, 64
          %676 = vsyncadd %s657, %s675
          %s677 = sadd.s32 %s38, %s37
          %s678 = smul.addr %s677, 64
          %s679 = scalar_lea.hbm %s6, %s678
          %s681 = sshll.u32 %s660, 4
          %s682 = int_to_ptr.vmem [resolvable:$true] %s681
          %684 = dma.vmem_to_hbm [thread:$0]  %s682, 64, %s679, %s657
        $region68: #{tpu_custom_call.1} parent=43 // pred_fallthru
          _
        // Predicated region
        $region69: #{tpu_custom_call.1} parent=43 // pred_check
          %p685 = pneg %p240
        $region70: #{tpu_custom_call.1} parent=43 // pred_check_branch
          %687 = sbr.rel (%p685) target = $region72
        $region71: #{tpu_custom_call.1} parent=43 // pred_region
          %s689 = ssub.s32 64, 64
          %690 = vsyncadd %s662, %s689
          %s691 = sadd.s32 %s38, %s37
          %s692 = smul.addr %s691, 64
          %s693 = scalar_lea.hbm %s7, %s692
          %s695 = sshll.u32 %s665, 4
          %s696 = int_to_ptr.vmem [resolvable:$true] %s695
          %698 = dma.vmem_to_hbm [thread:$0]  %s696, 64, %s693, %s662
        $region72: #{tpu_custom_call.1} parent=43 // pred_fallthru
          _
        // Predicated region
        $region73: #{tpu_custom_call.1} parent=43 // pred_check
          %p699 = pneg %p268
        $region74: #{tpu_custom_call.1} parent=43 // pred_check_branch
          %701 = sbr.rel (%p699) target = $region76
        $region75: #{tpu_custom_call.1} parent=43 // pred_region
          %s703 = ssub.s32 64, 64
          %704 = vsyncadd %s667, %s703
          %s705 = sadd.s32 %s38, %s37
          %s706 = smul.addr %s705, 64
          %s707 = scalar_lea.hbm %s8, %s706
          %s709 = sshll.u32 %s670, 4
          %s710 = int_to_ptr.vmem [resolvable:$true] %s709
          %712 = dma.vmem_to_hbm [thread:$0]  %s710, 64, %s707, %s667
        $region76: #{tpu_custom_call.1} parent=43 // pred_fallthru
          _
      $region44: #{tpu_custom_call.1} parent=5 // pred_fallthru
        _
      %p713 = scmp.le.s32.totalorder 2, %s28
      // Predicated region
      $region77: #{tpu_custom_call.1} parent=5 // pred_check
        %p714 = pneg %p713
      $region78: #{tpu_custom_call.1} parent=5 // pred_check_branch
        %716 = sbr.rel (%p714) target = $region80
      $region79: #{tpu_custom_call.1} parent=5 // pred_region
        %s717 = ssub.s32 %s28, 2
        // Predicated region
        $region81: #{tpu_custom_call.1} parent=79 // pred_check
          %p718 = pneg %p218
        $region82: #{tpu_custom_call.1} parent=79 // pred_check_branch
          %720 = sbr.rel (%p718) target = $region84
        $region83: #{tpu_custom_call.1} parent=79 // pred_region
          %s721 = sand.u32 %s203, 1
          %s722 = scalar_lea.sflag [#allocation4], %s721
          %s723 = sand.u32 %s203, 1
          %s724 = smul.addr %s723, 4
          %s725 = scalar_lea.vmem [#allocation11], %s724
          %726 = dma.done %s722, 64
        $region84: #{tpu_custom_call.1} parent=79 // pred_fallthru
          _
        // Predicated region
        $region85: #{tpu_custom_call.1} parent=79 // pred_check
          %p727 = pneg %p246
        $region86: #{tpu_custom_call.1} parent=79 // pred_check_branch
          %729 = sbr.rel (%p727) target = $region88
        $region87: #{tpu_custom_call.1} parent=79 // pred_region
          %s730 = sand.u32 %s34, 1
          %s731 = scalar_lea.sflag [#allocation13], %s730
          %s732 = sand.u32 %s231, 1
          %s733 = smul.addr %s732, 4
          %s734 = scalar_lea.vmem [#allocation12], %s733
          %735 = dma.done %s731, 64
        $region88: #{tpu_custom_call.1} parent=79 // pred_fallthru
          _
        // Predicated region
        $region89: #{tpu_custom_call.1} parent=79 // pred_check
          %p736 = pneg %p274
        $region90: #{tpu_custom_call.1} parent=79 // pred_check_branch
          %738 = sbr.rel (%p736) target = $region92
        $region91: #{tpu_custom_call.1} parent=79 // pred_region
          %s739 = sand.u32 %s34, 1
          %s740 = scalar_lea.sflag [#allocation13], %s739
          %s741 = sand.u32 %s259, 1
          %s742 = smul.addr %s741, 4
          %s743 = scalar_lea.vmem [#allocation14], %s742
          %744 = dma.done %s740, 64
        $region92: #{tpu_custom_call.1} parent=79 // pred_fallthru
          _
      $region80: #{tpu_custom_call.1} parent=5 // pred_fallthru
        _
    $region6: #{tpu_custom_call.1} parent=1 // loop_footer
      %s32 = sadd.s32 1, %s28
    $region7: #{tpu_custom_call.1} parent=1 // loop_footer_branch
      %27 = sbr.rel target = $region3
    $region8: #{tpu_custom_call.1} parent=1 // loop_exit
      _
    %745 = vsyncpa [#allocation3], 1
    %s746 = scalar_lea.sflag [#allocation3], 1
    %747 = vsyncpa %s746, 1
    %748 = vsyncpa [#allocation6], 1
    %s749 = scalar_lea.sflag [#allocation6], 1
    %750 = vsyncpa %s749, 1
    %751 = vsyncpa [#allocation9], 1
    %752 = vsyncpa [#allocation4], 1
    %s753 = scalar_lea.sflag [#allocation4], 1
    %754 = vsyncpa %s753, 1
    %755 = vsyncpa [#allocation13], 1
    %s756 = scalar_lea.sflag [#allocation13], 1
    %757 = vsyncpa %s756, 1

</llo_original>
